<compile_context>
chip_gen: v6e
topology: v6e:2x2x1
jax: 0.10.0
libtpu: 0.0.40
codegen_flags: <defaults>
</compile_context>

<pallas_src>
import functools

import jax
import jax.numpy as jnp
from jax.experimental import pallas as pl
from jax.experimental.pallas import tpu as pltpu


NEG_SLOPE = 0.01  # nn.LeakyReLU() default negative_slope


def _leaky_relu(v):
    # max(v, a*v) == LeakyReLU(v) for 0 < a < 1 ; cheaper than where(cmp,...)
    return jnp.maximum(v, NEG_SLOPE * v)


def _round_up(n, m):
    return ((n + m - 1) // m) * m


def _cdiv(a, b):
    return -(-a // b)


def _pad_to(a, rows, cols):
    return jnp.pad(a, ((0, rows - a.shape[0]), (0, cols - a.shape[1])))


def kcs_path_kernel(x_ref,
                    w1_ref, b1_ref,
                    w2_ref, b2_ref,
                    w34_ref, w4_ref, b4_ref,
                    w5_ref, b5_ref,
                    o_ref):
    cdt = w1_ref.dtype  # bf16 compute dtype for MXU inputs

    # psi = LeakyReLU(x @ W1 + b1); f32 accumulate, stored bf16 (only matmuls
    # consume it once layer-3 is folded into layer-4).
    psi = _leaky_relu(
        jnp.dot(x_ref[...], w1_ref[...], preferred_element_type=jnp.float32)
        + b1_ref[...]).astype(cdt)

    # d1 = LeakyReLU(psi @ W2 + b2), produced directly in bf16.
    d1 = _leaky_relu(
        jnp.dot(psi, w2_ref[...], preferred_element_type=jnp.float32)
        + b2_ref[...]).astype(cdt)

    # Layer 3 fused into layer 4:
    #   (d1 @ W3 + b3 + psi) @ W4 + b4 == d1 @ W34 + psi @ W4 + b4'
    pre4 = (jnp.dot(d1, w34_ref[...], preferred_element_type=jnp.float32)
            + jnp.dot(psi, w4_ref[...], preferred_element_type=jnp.float32)
            + b4_ref[...])
    y = _leaky_relu(pre4).astype(cdt)

    # Final linear to the (lane-padded) scalar output.
    o_ref[...] = (jnp.dot(y, w5_ref[...], preferred_element_type=jnp.float32)
                  + b5_ref[...]).astype(o_ref.dtype)


def prepare_params(params, compute_dtype=jnp.bfloat16):
    """Pad feature dims to multiples of 128, fold W3 into W4, cast to bf16 — ONCE.

    Returns padded arrays reusable across forward calls.  Zero padding is
    exact.  Re-run after every optimizer step if the weights change.
    """
    w1, w2, w3, w4, w5 = (params[f"w{i}"] for i in range(1, 6))
    b1, b2, b3, b4, b5 = (params[f"b{i}"] for i in range(1, 6))

    k = w1.shape[0]            # 225
    ch = w1.shape[1]           # channel
    cm = w4.shape[1]           # channel_mid

    k_p = _round_up(k, 128)    # 225 -> 256
    ch_p = _round_up(ch, 128)
    cm_p = _round_up(cm, 128)
    out_p = 128                # final output dim 1 -> lane-dense 128

    f32 = jnp.float32
    # Algebraic fusion computed in f32, then cast (exact pre-rounding).
    w34 = w3.astype(f32) @ w4.astype(f32)
    b4f = b3.astype(f32) @ w4.astype(f32) + b4.astype(f32)

    return {
        "w1": _pad_to(w1, k_p, ch_p).astype(compute_dtype),
        "b1": _pad_to(b1[None, :].astype(f32), 1, ch_p),
        "w2": _pad_to(w2, ch_p, ch_p).astype(compute_dtype),
        "b2": _pad_to(b2[None, :].astype(f32), 1, ch_p),
        "w34": _pad_to(w34, ch_p, cm_p).astype(compute_dtype),
        "w4": _pad_to(w4, ch_p, cm_p).astype(compute_dtype),
        "b4": _pad_to(b4f[None, :], 1, cm_p),
        "w5": _pad_to(w5, cm_p, out_p).astype(compute_dtype),
        "b5": _pad_to(b5[None, :].astype(f32), 1, out_p),
    }


@functools.partial(jax.jit, static_argnames=("tm",))
def kcs_path_forward(x, pp, tm=256):
    """x: (N, 225) float32. pp: output of prepare_params (padded, bf16 weights).

    tm: max batch row tile. 256 works well on v5e/v6e/v7x; 512 can help on
    v6e when N >= 1024.
    """
    n = x.shape[0]
    k_p = pp["w1"].shape[0]
    out_p = pp["w5"].shape[1]
    cdt = pp["w1"].dtype

    # Single fused host-side pass over x: bf16 cast + K pad (225 -> 256).
    # Halves the kernel's x DMA; no batch padding (handled by partial blocks).
    xp = jnp.pad(x, ((0, 0), (0, k_p - x.shape[1]))).astype(cdt)

    # Row tile: multiple of 8 (sublane), rebalanced so the last partial block
    # wastes at most 7 rows.  (On v7x an even grid length balances both TCs.)
    tm_eff = min(tm, _round_up(n, 8))
    grid_len = _cdiv(n, tm_eff)
    tm_eff = _round_up(_cdiv(n, grid_len), 8)
    grid_len = _cdiv(n, tm_eff)
    grid = (grid_len,)

    x_spec = pl.BlockSpec((tm_eff, k_p), lambda i: (i, 0))
    out_spec = pl.BlockSpec((tm_eff, out_p), lambda i: (i, 0))

    def resident(a):
        # Whole array as one block; constant block index -> DMA'd once and
        # kept resident in VMEM across the batch grid.
        # TODO(synk): single-buffer these (pl.Buffered(1)) once pipeline_mode
        # is plumbed through the TPU pallas_call path; VMEM fits either way.
        return pl.BlockSpec(a.shape, lambda i: (0, 0))

    ch_p = pp["w2"].shape[0]
    cm_p = pp["w5"].shape[0]
    weight_bytes = sum(int(a.size) * a.dtype.itemsize for a in pp.values())
    cost = pl.CostEstimate(
        flops=2 * n * (k_p * ch_p + ch_p * ch_p + 2 * ch_p * cm_p + cm_p * out_p),
        transcendentals=0,
        bytes_accessed=int(n * k_p * 2 + n * out_p * 4 + weight_bytes),
    )

    out_padded = pl.pallas_call(
        kcs_path_kernel,
        out_shape=jax.ShapeDtypeStruct((n, out_p), jnp.float32),
        grid=grid,
        in_specs=[x_spec,
                  resident(pp["w1"]), resident(pp["b1"]),
                  resident(pp["w2"]), resident(pp["b2"]),
                  resident(pp["w34"]), resident(pp["w4"]), resident(pp["b4"]),
                  resident(pp["w5"]), resident(pp["b5"])],
        out_specs=out_spec,
        compiler_params=pltpu.CompilerParams(
            dimension_semantics=("parallel",),   # megacore split on v7x
            vmem_limit_bytes=32 << 20,           # fits v7x's 64 MiB/TC VMEM
        ),
        cost_estimate=cost,
    )(xp, pp["w1"], pp["b1"], pp["w2"], pp["b2"],
      pp["w34"], pp["w4"], pp["b4"], pp["w5"], pp["b5"])

    return out_padded[:, :1]


def init_params(key, channel=256, channel_mid=128, dtype=jnp.float32):
    """Deterministic init mimicking nn.Linear's U(-1/sqrt(fan_in), 1/sqrt(fan_in))."""
    dims = [(225, channel), (channel, channel), (channel, channel),
            (channel, channel_mid), (channel_mid, 1)]
    params = {}
    for i, (fan_in, fan_out) in enumerate(dims, start=1):
        key, kw, kb = jax.random.split(key, 3)
        bound = 1.0 / (fan_in ** 0.5)
        params[f"w{i}"] = jax.random.uniform(
            kw, (fan_in, fan_out), dtype, minval=-bound, maxval=bound)
        params[f"b{i}"] = jax.random.uniform(
            kb, (fan_out,), dtype, minval=-bound, maxval=bound)
    return params


def reference_forward(x, p):
    """Pure-JAX f32 reference matching the PyTorch forward (unfused)."""
    psi = _leaky_relu(x @ p["w1"] + p["b1"])
    d1 = _leaky_relu(psi @ p["w2"] + p["b2"])
    d2 = d1 @ p["w3"] + p["b3"] + psi
    y = _leaky_relu(d2 @ p["w4"] + p["b4"])
    return y @ p["w5"] + p["b5"]


if __name__ == "__main__":
    key = jax.random.PRNGKey(0)
    k_x, k_p = jax.random.split(key)

    # Small shapes consistent with the module: N x 225 input (16-joint KCS path).
    batch = 8
    channel = 256       # small stand-in for the default 1000
    channel_mid = 128   # small stand-in for the default 100

    x = jax.random.normal(k_x, (batch, 225), dtype=jnp.float32)
    params = init_params(k_p, channel=channel, channel_mid=channel_mid)

    padded_params = prepare_params(params)   # pad + fuse + bf16-cast once

    out = kcs_path_forward(x, padded_params)
    out = jax.block_until_ready(out)
    assert out.shape == (batch, 1), out.shape

    # f32 reference; looser tolerance because kernel matmul inputs are bf16
    # (accumulation is still f32) and W3 is folded into W4 before casting.
    ref = reference_forward(x, params)
    assert jnp.allclose(out, ref, atol=5e-2, rtol=5e-2), (
        float(jnp.max(jnp.abs(out - ref))))

    print("KERNEL_OK")
</pallas_src>

<mosaic_0001>
module attributes {stable_mosaic.version = 11 : i64} {
  func.func @kcs_path_kernel(%arg0: i32, %arg1: memref<8x256xbf16, #tpu.memory_space<vmem>>, %arg2: memref<256x256xbf16, #tpu.memory_space<vmem>>, %arg3: memref<1x256xf32, #tpu.memory_space<vmem>>, %arg4: memref<256x256xbf16, #tpu.memory_space<vmem>>, %arg5: memref<1x256xf32, #tpu.memory_space<vmem>>, %arg6: memref<256x128xbf16, #tpu.memory_space<vmem>>, %arg7: memref<256x128xbf16, #tpu.memory_space<vmem>>, %arg8: memref<1x128xf32, #tpu.memory_space<vmem>>, %arg9: memref<128x128xbf16, #tpu.memory_space<vmem>>, %arg10: memref<1x128xf32, #tpu.memory_space<vmem>>, %arg11: memref<8x128xf32, #tpu.memory_space<vmem>>) attributes {dimension_semantics = [#tpu.dimension_semantics<parallel>], iteration_bounds = array<i64: 1>, scalar_prefetch = 0 : i64, scratch_operands = 0 : i64, tpu.core_type = #tpu.core_type<tc>, window_params = [{transform_indices = @transform_0, window_bounds = array<i64: 8, 256>}, {pipeline_mode = #tpu.pipeline_mode<synchronous>, transform_indices = @transform_1, window_bounds = array<i64: 256, 256>}, {pipeline_mode = #tpu.pipeline_mode<synchronous>, transform_indices = @transform_2, window_bounds = array<i64: 1, 256>}, {pipeline_mode = #tpu.pipeline_mode<synchronous>, transform_indices = @transform_3, window_bounds = array<i64: 256, 256>}, {pipeline_mode = #tpu.pipeline_mode<synchronous>, transform_indices = @transform_4, window_bounds = array<i64: 1, 256>}, {pipeline_mode = #tpu.pipeline_mode<synchronous>, transform_indices = @transform_5, window_bounds = array<i64: 256, 128>}, {pipeline_mode = #tpu.pipeline_mode<synchronous>, transform_indices = @transform_6, window_bounds = array<i64: 256, 128>}, {pipeline_mode = #tpu.pipeline_mode<synchronous>, transform_indices = @transform_7, window_bounds = array<i64: 1, 128>}, {pipeline_mode = #tpu.pipeline_mode<synchronous>, transform_indices = @transform_8, window_bounds = array<i64: 128, 128>}, {pipeline_mode = #tpu.pipeline_mode<synchronous>, transform_indices = @transform_9, window_bounds = array<i64: 1, 128>}, {transform_indices = @transform_10, window_bounds = array<i64: 8, 128>}]} {
    %c0 = arith.constant 0 : index
    %c0_0 = arith.constant 0 : index
    %0 = vector.load %arg1[%c0, %c0_0] : memref<8x256xbf16, #tpu.memory_space<vmem>>, vector<8x256xbf16>
    %c0_1 = arith.constant 0 : index
    %c0_2 = arith.constant 0 : index
    %1 = vector.load %arg2[%c0_1, %c0_2] : memref<256x256xbf16, #tpu.memory_space<vmem>>, vector<256x256xbf16>
    %cst = arith.constant dense<0.000000e+00> : vector<8x256xf32>
    %2 = tpu.matmul %0, %1, %cst {dimension_numbers = #tpu.dot_dimension_numbers<[1], [0], [0], [1], [0, 0, 1, 1], [], []>} : vector<8x256xbf16>, vector<256x256xbf16>, vector<8x256xf32> -> vector<8x256xf32>
    %c0_3 = arith.constant 0 : index
    %c0_4 = arith.constant 0 : index
    %3 = vector.load %arg3[%c0_3, %c0_4] : memref<1x256xf32, #tpu.memory_space<vmem>>, vector<1x256xf32>
    %4 = vector.broadcast %3 : vector<1x256xf32> to vector<8x256xf32>
    %5 = arith.addf %2, %4 : vector<8x256xf32>
    %cst_5 = arith.constant 0.00999999977 : f32
    %6 = vector.broadcast %cst_5 : f32 to vector<8x256xf32>
    %7 = arith.mulf %6, %5 : vector<8x256xf32>
    %8 = arith.maximumf %5, %7 : vector<8x256xf32>
    %9 = arith.truncf %8 : vector<8x256xf32> to vector<8x256xbf16>
    %c0_6 = arith.constant 0 : index
    %c0_7 = arith.constant 0 : index
    %10 = vector.load %arg4[%c0_6, %c0_7] : memref<256x256xbf16, #tpu.memory_space<vmem>>, vector<256x256xbf16>
    %cst_8 = arith.constant dense<0.000000e+00> : vector<8x256xf32>
    %11 = tpu.matmul %9, %10, %cst_8 {dimension_numbers = #tpu.dot_dimension_numbers<[1], [0], [0], [1], [0, 0, 1, 1], [], []>} : vector<8x256xbf16>, vector<256x256xbf16>, vector<8x256xf32> -> vector<8x256xf32>
    %c0_9 = arith.constant 0 : index
    %c0_10 = arith.constant 0 : index
    %12 = vector.load %arg5[%c0_9, %c0_10] : memref<1x256xf32, #tpu.memory_space<vmem>>, vector<1x256xf32>
    %13 = vector.broadcast %12 : vector<1x256xf32> to vector<8x256xf32>
    %14 = arith.addf %11, %13 : vector<8x256xf32>
    %cst_11 = arith.constant 0.00999999977 : f32
    %15 = vector.broadcast %cst_11 : f32 to vector<8x256xf32>
    %16 = arith.mulf %15, %14 : vector<8x256xf32>
    %17 = arith.maximumf %14, %16 : vector<8x256xf32>
    %18 = arith.truncf %17 : vector<8x256xf32> to vector<8x256xbf16>
    %c0_12 = arith.constant 0 : index
    %c0_13 = arith.constant 0 : index
    %19 = vector.load %arg6[%c0_12, %c0_13] : memref<256x128xbf16, #tpu.memory_space<vmem>>, vector<256x128xbf16>
    %cst_14 = arith.constant dense<0.000000e+00> : vector<8x128xf32>
    %20 = tpu.matmul %18, %19, %cst_14 {dimension_numbers = #tpu.dot_dimension_numbers<[1], [0], [0], [1], [0, 0, 1, 1], [], []>} : vector<8x256xbf16>, vector<256x128xbf16>, vector<8x128xf32> -> vector<8x128xf32>
    %c0_15 = arith.constant 0 : index
    %c0_16 = arith.constant 0 : index
    %21 = vector.load %arg7[%c0_15, %c0_16] : memref<256x128xbf16, #tpu.memory_space<vmem>>, vector<256x128xbf16>
    %cst_17 = arith.constant dense<0.000000e+00> : vector<8x128xf32>
    %22 = tpu.matmul %9, %21, %cst_17 {dimension_numbers = #tpu.dot_dimension_numbers<[1], [0], [0], [1], [0, 0, 1, 1], [], []>} : vector<8x256xbf16>, vector<256x128xbf16>, vector<8x128xf32> -> vector<8x128xf32>
    %23 = arith.addf %20, %22 : vector<8x128xf32>
    %c0_18 = arith.constant 0 : index
    %c0_19 = arith.constant 0 : index
    %24 = vector.load %arg8[%c0_18, %c0_19] : memref<1x128xf32, #tpu.memory_space<vmem>>, vector<1x128xf32>
    %25 = vector.broadcast %24 : vector<1x128xf32> to vector<8x128xf32>
    %26 = arith.addf %23, %25 : vector<8x128xf32>
    %cst_20 = arith.constant 0.00999999977 : f32
    %27 = vector.broadcast %cst_20 : f32 to vector<8x128xf32>
    %28 = arith.mulf %27, %26 : vector<8x128xf32>
    %29 = arith.maximumf %26, %28 : vector<8x128xf32>
    %30 = arith.truncf %29 : vector<8x128xf32> to vector<8x128xbf16>
    %c0_21 = arith.constant 0 : index
    %c0_22 = arith.constant 0 : index
    %31 = vector.load %arg9[%c0_21, %c0_22] : memref<128x128xbf16, #tpu.memory_space<vmem>>, vector<128x128xbf16>
    %cst_23 = arith.constant dense<0.000000e+00> : vector<8x128xf32>
    %32 = tpu.matmul %30, %31, %cst_23 {dimension_numbers = #tpu.dot_dimension_numbers<[1], [0], [0], [1], [0, 0, 1, 1], [], []>} : vector<8x128xbf16>, vector<128x128xbf16>, vector<8x128xf32> -> vector<8x128xf32>
    %c0_24 = arith.constant 0 : index
    %c0_25 = arith.constant 0 : index
    %33 = vector.load %arg10[%c0_24, %c0_25] : memref<1x128xf32, #tpu.memory_space<vmem>>, vector<1x128xf32>
    %34 = vector.broadcast %33 : vector<1x128xf32> to vector<8x128xf32>
    %35 = arith.addf %32, %34 : vector<8x128xf32>
    %c0_26 = arith.constant 0 : index
    %c0_27 = arith.constant 0 : index
    %36 = vector.load %arg11[%c0_26, %c0_27] : memref<8x128xf32, #tpu.memory_space<vmem>>, vector<8x128xf32>
    tpu.vector_store %arg11[%c0_26, %c0_27], %35 {strides = array<i32>} : memref<8x128xf32, #tpu.memory_space<vmem>>, vector<8x128xf32>,
    return
  }
  func.func @transform_0(%arg0: i32) -> (i32, i32) {
    %c0_i32 = arith.constant 0 : i32
    %c0_i32_0 = arith.constant 0 : i32
    return %arg0, %c0_i32 : i32, i32
  }
  func.func @transform_1(%arg0: i32) -> (i32, i32) {
    %c0_i32 = arith.constant 0 : i32
    %c0_i32_0 = arith.constant 0 : i32
    %c0_i32_1 = arith.constant 0 : i32
    return %c0_i32, %c0_i32_0 : i32, i32
  }
  func.func @transform_2(%arg0: i32) -> (i32, i32) {
    %c0_i32 = arith.constant 0 : i32
    %c0_i32_0 = arith.constant 0 : i32
    %c0_i32_1 = arith.constant 0 : i32
    return %c0_i32, %c0_i32_0 : i32, i32
  }
  func.func @transform_3(%arg0: i32) -> (i32, i32) {
    %c0_i32 = arith.constant 0 : i32
    %c0_i32_0 = arith.constant 0 : i32
    %c0_i32_1 = arith.constant 0 : i32
    return %c0_i32, %c0_i32_0 : i32, i32
  }
  func.func @transform_4(%arg0: i32) -> (i32, i32) {
    %c0_i32 = arith.constant 0 : i32
    %c0_i32_0 = arith.constant 0 : i32
    %c0_i32_1 = arith.constant 0 : i32
    return %c0_i32, %c0_i32_0 : i32, i32
  }
  func.func @transform_5(%arg0: i32) -> (i32, i32) {
    %c0_i32 = arith.constant 0 : i32
    %c0_i32_0 = arith.constant 0 : i32
    %c0_i32_1 = arith.constant 0 : i32
    return %c0_i32, %c0_i32_0 : i32, i32
  }
  func.func @transform_6(%arg0: i32) -> (i32, i32) {
    %c0_i32 = arith.constant 0 : i32
    %c0_i32_0 = arith.constant 0 : i32
    %c0_i32_1 = arith.constant 0 : i32
    return %c0_i32, %c0_i32_0 : i32, i32
  }
  func.func @transform_7(%arg0: i32) -> (i32, i32) {
    %c0_i32 = arith.constant 0 : i32
    %c0_i32_0 = arith.constant 0 : i32
    %c0_i32_1 = arith.constant 0 : i32
    return %c0_i32, %c0_i32_0 : i32, i32
  }
  func.func @transform_8(%arg0: i32) -> (i32, i32) {
    %c0_i32 = arith.constant 0 : i32
    %c0_i32_0 = arith.constant 0 : i32
    %c0_i32_1 = arith.constant 0 : i32
    return %c0_i32, %c0_i32_0 : i32, i32
  }
  func.func @transform_9(%arg0: i32) -> (i32, i32) {
    %c0_i32 = arith.constant 0 : i32
    %c0_i32_0 = arith.constant 0 : i32
    %c0_i32_1 = arith.constant 0 : i32
    return %c0_i32, %c0_i32_0 : i32, i32
  }
  func.func @transform_10(%arg0: i32) -> (i32, i32) {
    %c0_i32 = arith.constant 0 : i32
    %c0_i32_0 = arith.constant 0 : i32
    return %arg0, %c0_i32 : i32, i32
  }
}

</mosaic_0001>

<llo_original>
// kernel: kcs_path_forward.1
$region0: #{kcs_path_forward.1}
  #allocation0 [shape = 'u32[]', space=smem, size = 0x4, offset = 0x4, fixed_abs, tag = 'smem constant byte address 0x4 - core index']
  #allocation1 [shape = 'u32[144,128]{1,0:T(1,128)}', space=vmem, size = 0x12000, scoped, tag = 'internal scratch']
  %s0 = inlined_call_operand.vmem [shape: bf16[8,256], index: 0, kind: input, shape index: {}]
  %s1 = inlined_call_operand.hbm [shape: bf16[256,256], index: 1, kind: input, shape index: {}]
  %s2 = inlined_call_operand.vmem [shape: f32[1,256], index: 2, kind: input, shape index: {}]
  %s3 = inlined_call_operand.hbm [shape: bf16[256,256], index: 3, kind: input, shape index: {}]
  %s4 = inlined_call_operand.vmem [shape: f32[1,256], index: 4, kind: input, shape index: {}]
  %s5 = inlined_call_operand.hbm [shape: bf16[256,128], index: 5, kind: input, shape index: {}]
  %s6 = inlined_call_operand.hbm [shape: bf16[256,128], index: 6, kind: input, shape index: {}]
  %s7 = inlined_call_operand.vmem [shape: f32[1,128], index: 7, kind: input, shape index: {}]
  %s8 = inlined_call_operand.hbm [shape: bf16[128,128], index: 8, kind: input, shape index: {}]
  %s9 = inlined_call_operand.vmem [shape: f32[1,128], index: 9, kind: input, shape index: {}]
  %s10 = inlined_call_operand.vmem [shape: f32[8,128], index: 10, kind: output, shape index: {}]
  %s11 = sld [smem:[#allocation0]]
  $region70: #{kcs_path_forward.1} parent=0
    _
  %s13 = ssub.s32 1, %s11
  %s14 = scalar_select 0, %s13, %s11
  $region1: #{kcs_path_forward.1} parent=0
    #allocation2 [shape = 'u8[131072]{0}', space=vmem, size = 0x20000, scoped, tag = 'input window, operand 1, single buffered']
    #allocation3 [shape = 's32[1]{0}', space=sflag, size = 0x4, scoped, tag = 'scoped memory for kcs_path_forward.1']
    #allocation4 [shape = 'u8[131072]{0}', space=vmem, size = 0x20000, scoped, tag = 'input window, operand 3, single buffered']
    #allocation5 [shape = 's32[1]{0}', space=sflag, size = 0x4, scoped, tag = 'scoped memory for kcs_path_forward.1']
    #allocation6 [shape = 'u8[65536]{0}', space=vmem, size = 0x10000, scoped, tag = 'input window, operand 5, single buffered']
    #allocation7 [shape = 'u8[65536]{0}', space=vmem, size = 0x10000, scoped, tag = 'input window, operand 6, single buffered']
    #allocation8 [shape = 's32[1]{0}', space=sflag, size = 0x4, scoped, tag = 'scoped memory for kcs_path_forward.1']
    #allocation9 [shape = 'u8[32768]{0}', space=vmem, size = 0x8000, scoped, tag = 'input window, operand 8, single buffered']
    %15 = vsyncpa [#allocation3], 0
    %16 = vsyncpa [#allocation5], 0
    %17 = vsyncpa [#allocation8], 0
    // Predicated region
    $region2: #{kcs_path_forward.1} parent=1 // pred_check
      _
    $region3: #{kcs_path_forward.1} parent=1 // pred_check_branch
      %19 = sbr.rel (0) target = $region5
    $region4: #{kcs_path_forward.1} parent=1 // pred_region
      _
    $region5: #{kcs_path_forward.1} parent=1 // pred_fallthru
      _
    // Predicated region
    $region6: #{kcs_path_forward.1} parent=1 // pred_check
      _
    $region7: #{kcs_path_forward.1} parent=1 // pred_check_branch
      %21 = sbr.rel (0) target = $region9
    $region8: #{kcs_path_forward.1} parent=1 // pred_region
      %s23 = ssub.s32 4096, 4096
      %24 = vsyncadd [#allocation3], %s23
      %s25 = sshll.u32 [#allocation2], 4
      %s26 = int_to_ptr.vmem [resolvable:$true] %s25
      %31 = dma.hbm_to_vmem [thread:$0]  %s1, 4096, %s26, [#allocation3], 128, 128, 8
    $region9: #{kcs_path_forward.1} parent=1 // pred_fallthru
      _
    // Predicated region
    $region10: #{kcs_path_forward.1} parent=1 // pred_check
      _
    $region11: #{kcs_path_forward.1} parent=1 // pred_check_branch
      %33 = sbr.rel (0) target = $region13
    $region12: #{kcs_path_forward.1} parent=1 // pred_region
      _
    $region13: #{kcs_path_forward.1} parent=1 // pred_fallthru
      _
    // Predicated region
    $region14: #{kcs_path_forward.1} parent=1 // pred_check
      _
    $region15: #{kcs_path_forward.1} parent=1 // pred_check_branch
      %35 = sbr.rel (0) target = $region17
    $region16: #{kcs_path_forward.1} parent=1 // pred_region
      %s37 = ssub.s32 4096, 4096
      %38 = vsyncadd [#allocation5], %s37
      %s39 = sshll.u32 [#allocation4], 4
      %s40 = int_to_ptr.vmem [resolvable:$true] %s39
      %45 = dma.hbm_to_vmem [thread:$0]  %s3, 4096, %s40, [#allocation5], 128, 128, 8
    $region17: #{kcs_path_forward.1} parent=1 // pred_fallthru
      _
    // Predicated region
    $region18: #{kcs_path_forward.1} parent=1 // pred_check
      _
    $region19: #{kcs_path_forward.1} parent=1 // pred_check_branch
      %47 = sbr.rel (0) target = $region21
    $region20: #{kcs_path_forward.1} parent=1 // pred_region
      _
    $region21: #{kcs_path_forward.1} parent=1 // pred_fallthru
      _
    // Predicated region
    $region22: #{kcs_path_forward.1} parent=1 // pred_check
      _
    $region23: #{kcs_path_forward.1} parent=1 // pred_check_branch
      %49 = sbr.rel (0) target = $region25
    $region24: #{kcs_path_forward.1} parent=1 // pred_region
      %s51 = ssub.s32 2048, 2048
      %52 = vsyncadd [#allocation5], %s51
      %s53 = sshll.u32 [#allocation6], 4
      %s54 = int_to_ptr.vmem [resolvable:$true] %s53
      %59 = dma.hbm_to_vmem [thread:$0]  %s5, 2048, %s54, [#allocation5], 64, 64, 4
    $region25: #{kcs_path_forward.1} parent=1 // pred_fallthru
      _
    // Predicated region
    $region26: #{kcs_path_forward.1} parent=1 // pred_check
      _
    $region27: #{kcs_path_forward.1} parent=1 // pred_check_branch
      %61 = sbr.rel (0) target = $region29
    $region28: #{kcs_path_forward.1} parent=1 // pred_region
      %s63 = ssub.s32 2048, 2048
      %64 = vsyncadd [#allocation8], %s63
      %s65 = sshll.u32 [#allocation7], 4
      %s66 = int_to_ptr.vmem [resolvable:$true] %s65
      %71 = dma.hbm_to_vmem [thread:$0]  %s6, 2048, %s66, [#allocation8], 64, 64, 4
    $region29: #{kcs_path_forward.1} parent=1 // pred_fallthru
      _
    // Predicated region
    $region30: #{kcs_path_forward.1} parent=1 // pred_check
      _
    $region31: #{kcs_path_forward.1} parent=1 // pred_check_branch
      %73 = sbr.rel (0) target = $region33
    $region32: #{kcs_path_forward.1} parent=1 // pred_region
      _
    $region33: #{kcs_path_forward.1} parent=1 // pred_fallthru
      _
    // Predicated region
    $region34: #{kcs_path_forward.1} parent=1 // pred_check
      _
    $region35: #{kcs_path_forward.1} parent=1 // pred_check_branch
      %75 = sbr.rel (0) target = $region37
    $region36: #{kcs_path_forward.1} parent=1 // pred_region
      %s77 = ssub.s32 1024, 1024
      %78 = vsyncadd [#allocation8], %s77
      %s79 = sshll.u32 [#allocation9], 4
      %s80 = int_to_ptr.vmem [resolvable:$true] %s79
      %85 = dma.hbm_to_vmem [thread:$0]  %s8, 1024, %s80, [#allocation8], 64, 64, 4
    $region37: #{kcs_path_forward.1} parent=1 // pred_fallthru
      _
    // Predicated region
    $region38: #{kcs_path_forward.1} parent=1 // pred_check
      _
    $region39: #{kcs_path_forward.1} parent=1 // pred_check_branch
      %87 = sbr.rel (0) target = $region41
    $region40: #{kcs_path_forward.1} parent=1 // pred_region
      _
    $region41: #{kcs_path_forward.1} parent=1 // pred_fallthru
      _
    // Predicated region
    $region42: #{kcs_path_forward.1} parent=1 // pred_check
      _
    $region43: #{kcs_path_forward.1} parent=1 // pred_check_branch
      %89 = sbr.rel (0) target = $region45
    $region44: #{kcs_path_forward.1} parent=1 // pred_region
      %90 = dma.done [#allocation3], 4096
    $region45: #{kcs_path_forward.1} parent=1 // pred_fallthru
      _
    // Predicated region
    $region46: #{kcs_path_forward.1} parent=1 // pred_check
      _
    $region47: #{kcs_path_forward.1} parent=1 // pred_check_branch
      %92 = sbr.rel (0) target = $region49
    $region48: #{kcs_path_forward.1} parent=1 // pred_region
      %93 = dma.done [#allocation5], 4096
    $region49: #{kcs_path_forward.1} parent=1 // pred_fallthru
      _
    // Predicated region
    $region50: #{kcs_path_forward.1} parent=1 // pred_check
      _
    $region51: #{kcs_path_forward.1} parent=1 // pred_check_branch
      %95 = sbr.rel (0) target = $region53
    $region52: #{kcs_path_forward.1} parent=1 // pred_region
      %96 = dma.done [#allocation5], 2048
    $region53: #{kcs_path_forward.1} parent=1 // pred_fallthru
      _
    // Predicated region
    $region54: #{kcs_path_forward.1} parent=1 // pred_check
      _
    $region55: #{kcs_path_forward.1} parent=1 // pred_check_branch
      %98 = sbr.rel (0) target = $region57
    $region56: #{kcs_path_forward.1} parent=1 // pred_region
      %99 = dma.done [#allocation8], 2048
    $region57: #{kcs_path_forward.1} parent=1 // pred_fallthru
      _
    // Predicated region
    $region58: #{kcs_path_forward.1} parent=1 // pred_check
      _
    $region59: #{kcs_path_forward.1} parent=1 // pred_check_branch
      %101 = sbr.rel (0) target = $region61
    $region60: #{kcs_path_forward.1} parent=1 // pred_region
      %102 = dma.done [#allocation8], 1024
    $region61: #{kcs_path_forward.1} parent=1 // pred_fallthru
      _
    %v104 = vld [vmem:[%s0] sm:$0xff]
    %v105 = vld [vmem:[#allocation2] sm:$0xff]
    %v106 = vld [vmem:[#allocation2 + $0x8] sm:$0xff]
    %v107 = vld [vmem:[#allocation2 + $0x10] sm:$0xff]
    %v108 = vld [vmem:[#allocation2 + $0x18] sm:$0xff]
    %v109 = vld [vmem:[#allocation2 + $0x20] sm:$0xff]
    %v110 = vld [vmem:[#allocation2 + $0x28] sm:$0xff]
    %v111 = vld [vmem:[#allocation2 + $0x30] sm:$0xff]
    %v112 = vld [vmem:[#allocation2 + $0x38] sm:$0xff]
    %v113 = vld [vmem:[#allocation2 + $0x40] sm:$0xff]
    %v114 = vld [vmem:[#allocation2 + $0x48] sm:$0xff]
    %v115 = vld [vmem:[#allocation2 + $0x50] sm:$0xff]
    %v116 = vld [vmem:[#allocation2 + $0x58] sm:$0xff]
    %v117 = vld [vmem:[#allocation2 + $0x60] sm:$0xff]
    %v118 = vld [vmem:[#allocation2 + $0x68] sm:$0xff]
    %v119 = vld [vmem:[#allocation2 + $0x70] sm:$0xff]
    %v120 = vld [vmem:[#allocation2 + $0x78] sm:$0xff]
    %v121 = vld [vmem:[#allocation2 + $0x80] sm:$0xff]
    %v122 = vld [vmem:[#allocation2 + $0x88] sm:$0xff]
    %v123 = vld [vmem:[#allocation2 + $0x90] sm:$0xff]
    %v124 = vld [vmem:[#allocation2 + $0x98] sm:$0xff]
    %v125 = vld [vmem:[#allocation2 + $0xa0] sm:$0xff]
    %v126 = vld [vmem:[#allocation2 + $0xa8] sm:$0xff]
    %v127 = vld [vmem:[#allocation2 + $0xb0] sm:$0xff]
    %v128 = vld [vmem:[#allocation2 + $0xb8] sm:$0xff]
    %v129 = vld [vmem:[#allocation2 + $0xc0] sm:$0xff]
    %v130 = vld [vmem:[#allocation2 + $0xc8] sm:$0xff]
    %v131 = vld [vmem:[#allocation2 + $0xd0] sm:$0xff]
    %v132 = vld [vmem:[#allocation2 + $0xd8] sm:$0xff]
    %v133 = vld [vmem:[#allocation2 + $0xe0] sm:$0xff]
    %v134 = vld [vmem:[#allocation2 + $0xe8] sm:$0xff]
    %v135 = vld [vmem:[#allocation2 + $0xf0] sm:$0xff]
    %v136 = vld [vmem:[#allocation2 + $0xf8] sm:$0xff]
    %v137 = vld [vmem:[%s2] sm:$0x3]
    %v139 = vlaneseq
    %v140 = vshrl.u32 %v139, 7
    %v141 = vsub.s32 0, %v140
    %v142 = vrot.slane %v137, %v141
    %v143 = vlaneseq
    %v144 = vshrl.u32 %v143, 7
    %v145 = vsub.s32 1, %v144
    %v146 = vrot.slane %v137, %v145
    %v150 = vunpack.c.l.b16 %v104
    %v151 = vunpack.c.h.b16 %v104
    %v152 = vpack.c.b16 %v150, %v150
    %v153 = vpack.c.b16 %v151, %v151
    %v188 = vunpack.c.l.b16 %v105
    %v189 = vunpack.c.h.b16 %v105
    %v190 = vunpack.c.l.b16 %v106
    %v191 = vunpack.c.h.b16 %v106
    %v192 = vunpack.c.l.b16 %v107
    %v193 = vunpack.c.h.b16 %v107
    %v194 = vunpack.c.l.b16 %v108
    %v195 = vunpack.c.h.b16 %v108
    %v196 = vunpack.c.l.b16 %v109
    %v197 = vunpack.c.h.b16 %v109
    %v198 = vunpack.c.l.b16 %v110
    %v199 = vunpack.c.h.b16 %v110
    %v200 = vunpack.c.l.b16 %v111
    %v201 = vunpack.c.h.b16 %v111
    %v202 = vunpack.c.l.b16 %v112
    %v203 = vunpack.c.h.b16 %v112
    %v204 = vunpack.c.l.b16 %v113
    %v205 = vunpack.c.h.b16 %v113
    %v206 = vunpack.c.l.b16 %v114
    %v207 = vunpack.c.h.b16 %v114
    %v208 = vunpack.c.l.b16 %v115
    %v209 = vunpack.c.h.b16 %v115
    %v210 = vunpack.c.l.b16 %v116
    %v211 = vunpack.c.h.b16 %v116
    %v212 = vunpack.c.l.b16 %v117
    %v213 = vunpack.c.h.b16 %v117
    %v214 = vunpack.c.l.b16 %v118
    %v215 = vunpack.c.h.b16 %v118
    %v216 = vunpack.c.l.b16 %v119
    %v217 = vunpack.c.h.b16 %v119
    %v218 = vunpack.c.l.b16 %v120
    %v219 = vunpack.c.h.b16 %v120
    %v220 = vunpack.c.l.b16 %v121
    %v221 = vunpack.c.h.b16 %v121
    %v222 = vunpack.c.l.b16 %v122
    %v223 = vunpack.c.h.b16 %v122
    %v224 = vunpack.c.l.b16 %v123
    %v225 = vunpack.c.h.b16 %v123
    %v226 = vunpack.c.l.b16 %v124
    %v227 = vunpack.c.h.b16 %v124
    %v228 = vunpack.c.l.b16 %v125
    %v229 = vunpack.c.h.b16 %v125
    %v230 = vunpack.c.l.b16 %v126
    %v231 = vunpack.c.h.b16 %v126
    %v232 = vunpack.c.l.b16 %v127
    %v233 = vunpack.c.h.b16 %v127
    %v234 = vunpack.c.l.b16 %v128
    %v235 = vunpack.c.h.b16 %v128
    %v236 = vunpack.c.l.b16 %v129
    %v237 = vunpack.c.h.b16 %v129
    %v238 = vunpack.c.l.b16 %v130
    %v239 = vunpack.c.h.b16 %v130
    %v240 = vunpack.c.l.b16 %v131
    %v241 = vunpack.c.h.b16 %v131
    %v242 = vunpack.c.l.b16 %v132
    %v243 = vunpack.c.h.b16 %v132
    %v244 = vunpack.c.l.b16 %v133
    %v245 = vunpack.c.h.b16 %v133
    %v246 = vunpack.c.l.b16 %v134
    %v247 = vunpack.c.h.b16 %v134
    %v248 = vunpack.c.l.b16 %v135
    %v249 = vunpack.c.h.b16 %v135
    %v250 = vunpack.c.l.b16 %v136
    %v251 = vunpack.c.h.b16 %v136
    %v252 = vpack.c.b16 %v190, %v188
    %v253 = vpack.c.b16 %v191, %v189
    %v254 = vpack.c.b16 %v194, %v192
    %v255 = vpack.c.b16 %v195, %v193
    %v256 = vpack.c.b16 %v198, %v196
    %v257 = vpack.c.b16 %v199, %v197
    %v258 = vpack.c.b16 %v202, %v200
    %v259 = vpack.c.b16 %v203, %v201
    %v260 = vpack.c.b16 %v206, %v204
    %v261 = vpack.c.b16 %v207, %v205
    %v262 = vpack.c.b16 %v210, %v208
    %v263 = vpack.c.b16 %v211, %v209
    %v264 = vpack.c.b16 %v214, %v212
    %v265 = vpack.c.b16 %v215, %v213
    %v266 = vpack.c.b16 %v218, %v216
    %v267 = vpack.c.b16 %v219, %v217
    %v268 = vpack.c.b16 %v222, %v220
    %v269 = vpack.c.b16 %v223, %v221
    %v270 = vpack.c.b16 %v226, %v224
    %v271 = vpack.c.b16 %v227, %v225
    %v272 = vpack.c.b16 %v230, %v228
    %v273 = vpack.c.b16 %v231, %v229
    %v274 = vpack.c.b16 %v234, %v232
    %v275 = vpack.c.b16 %v235, %v233
    %v276 = vpack.c.b16 %v238, %v236
    %v277 = vpack.c.b16 %v239, %v237
    %v278 = vpack.c.b16 %v242, %v240
    %v279 = vpack.c.b16 %v243, %v241
    %v280 = vpack.c.b16 %v246, %v244
    %v281 = vpack.c.b16 %v247, %v245
    %v282 = vpack.c.b16 %v250, %v248
    %v283 = vpack.c.b16 %v251, %v249
    %316 = vmatprep.subr.bf16.mxu0 %v267
    %317 = vmatpush1.bf16.msra.mxu0 %v266
    %318 = vmatprep.subr.bf16.mxu0 %v265
    %319 = vmatpush1.bf16.msra.mxu0 %v264
    %320 = vmatprep.subr.bf16.mxu0 %v263
    %321 = vmatpush1.bf16.msra.mxu0 %v262
    %322 = vmatprep.subr.bf16.mxu0 %v261
    %323 = vmatpush1.bf16.msra.mxu0 %v260
    %324 = vmatprep.subr.bf16.mxu0 %v259
    %325 = vmatpush1.bf16.msra.mxu0 %v258
    %326 = vmatprep.subr.bf16.mxu0 %v257
    %327 = vmatpush1.bf16.msra.mxu0 %v256
    %328 = vmatprep.subr.bf16.mxu0 %v255
    %329 = vmatpush1.bf16.msra.mxu0 %v254
    %330 = vmatprep.subr.bf16.mxu0 %v253
    %331 = vmatpush1.bf16.msra.mxu0 %v252
    %332 = vmatprep.subr.bf16.mxu0 %v283
    %333 = vmatpush2.bf16.msra.mxu0 %v282
    %334 = vmatprep.subr.bf16.mxu0 %v281
    %335 = vmatpush2.bf16.msra.mxu0 %v280
    %336 = vmatprep.subr.bf16.mxu0 %v279
    %337 = vmatpush2.bf16.msra.mxu0 %v278
    %338 = vmatprep.subr.bf16.mxu0 %v277
    %339 = vmatpush2.bf16.msra.mxu0 %v276
    %340 = vmatprep.subr.bf16.mxu0 %v275
    %341 = vmatpush2.bf16.msra.mxu0 %v274
    %342 = vmatprep.subr.bf16.mxu0 %v273
    %343 = vmatpush2.bf16.msra.mxu0 %v272
    %344 = vmatprep.subr.bf16.mxu0 %v271
    %345 = vmatpush2.bf16.msra.mxu0 %v270
    %346 = vmatprep.subr.bf16.mxu0 %v269
    %347 = vmatpush2.bf16.msra.mxu0 %v268
    %348 = vmatprep.mubr.bf16.mxu0 %v153
    %349 = vmatmul.mubr.bf16.gmra.mxu0 %v152
    %v350 = vpop.f32.mrf.mxu0
    %v351 = vadd.f32 %v142, %v350
    %v352 = vpop.f32.mrf.mxu0
    %v353 = vadd.f32 %v146, %v352
    %v354 = vpop.f32.mrf.mxu0
    %v355 = vpop.f32.mrf.mxu0
    %356 = vdwg.mxu0
    %v357 = vmul.f32 %v351, 0.01
    %v358 = vmul.f32 %v353, 0.01
    %v359 = vmax.f32 %v351, %v357
    %v360 = vmax.f32 %v353, %v358
    %v361 = vpack.c.bf16 %v359, %v359
    %v362 = vpack.c.bf16 %v360, %v360
    %v363 = vld [vmem:[#allocation4] sm:$0xff]
    %v364 = vld [vmem:[#allocation4 + $0x8] sm:$0xff]
    %v365 = vld [vmem:[#allocation4 + $0x10] sm:$0xff]
    %v366 = vld [vmem:[#allocation4 + $0x18] sm:$0xff]
    %v367 = vld [vmem:[#allocation4 + $0x20] sm:$0xff]
    %v368 = vld [vmem:[#allocation4 + $0x28] sm:$0xff]
    %v369 = vld [vmem:[#allocation4 + $0x30] sm:$0xff]
    %v370 = vld [vmem:[#allocation4 + $0x38] sm:$0xff]
    %v371 = vld [vmem:[#allocation4 + $0x40] sm:$0xff]
    %v372 = vld [vmem:[#allocation4 + $0x48] sm:$0xff]
    %v373 = vld [vmem:[#allocation4 + $0x50] sm:$0xff]
    %v374 = vld [vmem:[#allocation4 + $0x58] sm:$0xff]
    %v375 = vld [vmem:[#allocation4 + $0x60] sm:$0xff]
    %v376 = vld [vmem:[#allocation4 + $0x68] sm:$0xff]
    %v377 = vld [vmem:[#allocation4 + $0x70] sm:$0xff]
    %v378 = vld [vmem:[#allocation4 + $0x78] sm:$0xff]
    %v379 = vld [vmem:[#allocation4 + $0x80] sm:$0xff]
    %v380 = vld [vmem:[#allocation4 + $0x88] sm:$0xff]
    %v381 = vld [vmem:[#allocation4 + $0x90] sm:$0xff]
    %v382 = vld [vmem:[#allocation4 + $0x98] sm:$0xff]
    %v383 = vld [vmem:[#allocation4 + $0xa0] sm:$0xff]
    %v384 = vld [vmem:[#allocation4 + $0xa8] sm:$0xff]
    %v385 = vld [vmem:[#allocation4 + $0xb0] sm:$0xff]
    %v386 = vld [vmem:[#allocation4 + $0xb8] sm:$0xff]
    %v387 = vld [vmem:[#allocation4 + $0xc0] sm:$0xff]
    %v388 = vld [vmem:[#allocation4 + $0xc8] sm:$0xff]
    %v389 = vld [vmem:[#allocation4 + $0xd0] sm:$0xff]
    %v390 = vld [vmem:[#allocation4 + $0xd8] sm:$0xff]
    %v391 = vld [vmem:[#allocation4 + $0xe0] sm:$0xff]
    %v392 = vld [vmem:[#allocation4 + $0xe8] sm:$0xff]
    %v393 = vld [vmem:[#allocation4 + $0xf0] sm:$0xff]
    %v394 = vld [vmem:[#allocation4 + $0xf8] sm:$0xff]
    %v395 = vld [vmem:[%s4] sm:$0x3]
    %v397 = vlaneseq
    %v398 = vshrl.u32 %v397, 7
    %v399 = vsub.s32 0, %v398
    %v400 = vrot.slane %v395, %v399
    %v401 = vlaneseq
    %v402 = vshrl.u32 %v401, 7
    %v403 = vsub.s32 1, %v402
    %v404 = vrot.slane %v395, %v403
    %v439 = vunpack.c.l.b16 %v363
    %v440 = vunpack.c.h.b16 %v363
    %v441 = vunpack.c.l.b16 %v364
    %v442 = vunpack.c.h.b16 %v364
    %v443 = vunpack.c.l.b16 %v365
    %v444 = vunpack.c.h.b16 %v365
    %v445 = vunpack.c.l.b16 %v366
    %v446 = vunpack.c.h.b16 %v366
    %v447 = vunpack.c.l.b16 %v367
    %v448 = vunpack.c.h.b16 %v367
    %v449 = vunpack.c.l.b16 %v368
    %v450 = vunpack.c.h.b16 %v368
    %v451 = vunpack.c.l.b16 %v369
    %v452 = vunpack.c.h.b16 %v369
    %v453 = vunpack.c.l.b16 %v370
    %v454 = vunpack.c.h.b16 %v370
    %v455 = vunpack.c.l.b16 %v371
    %v456 = vunpack.c.h.b16 %v371
    %v457 = vunpack.c.l.b16 %v372
    %v458 = vunpack.c.h.b16 %v372
    %v459 = vunpack.c.l.b16 %v373
    %v460 = vunpack.c.h.b16 %v373
    %v461 = vunpack.c.l.b16 %v374
    %v462 = vunpack.c.h.b16 %v374
    %v463 = vunpack.c.l.b16 %v375
    %v464 = vunpack.c.h.b16 %v375
    %v465 = vunpack.c.l.b16 %v376
    %v466 = vunpack.c.h.b16 %v376
    %v467 = vunpack.c.l.b16 %v377
    %v468 = vunpack.c.h.b16 %v377
    %v469 = vunpack.c.l.b16 %v378
    %v470 = vunpack.c.h.b16 %v378
    %v471 = vunpack.c.l.b16 %v379
    %v472 = vunpack.c.h.b16 %v379
    %v473 = vunpack.c.l.b16 %v380
    %v474 = vunpack.c.h.b16 %v380
    %v475 = vunpack.c.l.b16 %v381
    %v476 = vunpack.c.h.b16 %v381
    %v477 = vunpack.c.l.b16 %v382
    %v478 = vunpack.c.h.b16 %v382
    %v479 = vunpack.c.l.b16 %v383
    %v480 = vunpack.c.h.b16 %v383
    %v481 = vunpack.c.l.b16 %v384
    %v482 = vunpack.c.h.b16 %v384
    %v483 = vunpack.c.l.b16 %v385
    %v484 = vunpack.c.h.b16 %v385
    %v485 = vunpack.c.l.b16 %v386
    %v486 = vunpack.c.h.b16 %v386
    %v487 = vunpack.c.l.b16 %v387
    %v488 = vunpack.c.h.b16 %v387
    %v489 = vunpack.c.l.b16 %v388
    %v490 = vunpack.c.h.b16 %v388
    %v491 = vunpack.c.l.b16 %v389
    %v492 = vunpack.c.h.b16 %v389
    %v493 = vunpack.c.l.b16 %v390
    %v494 = vunpack.c.h.b16 %v390
    %v495 = vunpack.c.l.b16 %v391
    %v496 = vunpack.c.h.b16 %v391
    %v497 = vunpack.c.l.b16 %v392
    %v498 = vunpack.c.h.b16 %v392
    %v499 = vunpack.c.l.b16 %v393
    %v500 = vunpack.c.h.b16 %v393
    %v501 = vunpack.c.l.b16 %v394
    %v502 = vunpack.c.h.b16 %v394
    %v503 = vpack.c.b16 %v441, %v439
    %v504 = vpack.c.b16 %v442, %v440
    %v505 = vpack.c.b16 %v445, %v443
    %v506 = vpack.c.b16 %v446, %v444
    %v507 = vpack.c.b16 %v449, %v447
    %v508 = vpack.c.b16 %v450, %v448
    %v509 = vpack.c.b16 %v453, %v451
    %v510 = vpack.c.b16 %v454, %v452
    %v511 = vpack.c.b16 %v457, %v455
    %v512 = vpack.c.b16 %v458, %v456
    %v513 = vpack.c.b16 %v461, %v459
    %v514 = vpack.c.b16 %v462, %v460
    %v515 = vpack.c.b16 %v465, %v463
    %v516 = vpack.c.b16 %v466, %v464
    %v517 = vpack.c.b16 %v469, %v467
    %v518 = vpack.c.b16 %v470, %v468
    %v519 = vpack.c.b16 %v473, %v471
    %v520 = vpack.c.b16 %v474, %v472
    %v521 = vpack.c.b16 %v477, %v475
    %v522 = vpack.c.b16 %v478, %v476
    %v523 = vpack.c.b16 %v481, %v479
    %v524 = vpack.c.b16 %v482, %v480
    %v525 = vpack.c.b16 %v485, %v483
    %v526 = vpack.c.b16 %v486, %v484
    %v527 = vpack.c.b16 %v489, %v487
    %v528 = vpack.c.b16 %v490, %v488
    %v529 = vpack.c.b16 %v493, %v491
    %v530 = vpack.c.b16 %v494, %v492
    %v531 = vpack.c.b16 %v497, %v495
    %v532 = vpack.c.b16 %v498, %v496
    %v533 = vpack.c.b16 %v501, %v499
    %v534 = vpack.c.b16 %v502, %v500
    %567 = vmatprep.subr.bf16.mxu0 %v518
    %568 = vmatpush1.bf16.msra.mxu0 %v517
    %569 = vmatprep.subr.bf16.mxu0 %v516
    %570 = vmatpush1.bf16.msra.mxu0 %v515
    %571 = vmatprep.subr.bf16.mxu0 %v514
    %572 = vmatpush1.bf16.msra.mxu0 %v513
    %573 = vmatprep.subr.bf16.mxu0 %v512
    %574 = vmatpush1.bf16.msra.mxu0 %v511
    %575 = vmatprep.subr.bf16.mxu0 %v510
    %576 = vmatpush1.bf16.msra.mxu0 %v509
    %577 = vmatprep.subr.bf16.mxu0 %v508
    %578 = vmatpush1.bf16.msra.mxu0 %v507
    %579 = vmatprep.subr.bf16.mxu0 %v506
    %580 = vmatpush1.bf16.msra.mxu0 %v505
    %581 = vmatprep.subr.bf16.mxu0 %v504
    %582 = vmatpush1.bf16.msra.mxu0 %v503
    %583 = vmatprep.subr.bf16.mxu0 %v534
    %584 = vmatpush2.bf16.msra.mxu0 %v533
    %585 = vmatprep.subr.bf16.mxu0 %v532
    %586 = vmatpush2.bf16.msra.mxu0 %v531
    %587 = vmatprep.subr.bf16.mxu0 %v530
    %588 = vmatpush2.bf16.msra.mxu0 %v529
    %589 = vmatprep.subr.bf16.mxu0 %v528
    %590 = vmatpush2.bf16.msra.mxu0 %v527
    %591 = vmatprep.subr.bf16.mxu0 %v526
    %592 = vmatpush2.bf16.msra.mxu0 %v525
    %593 = vmatprep.subr.bf16.mxu0 %v524
    %594 = vmatpush2.bf16.msra.mxu0 %v523
    %595 = vmatprep.subr.bf16.mxu0 %v522
    %596 = vmatpush2.bf16.msra.mxu0 %v521
    %597 = vmatprep.subr.bf16.mxu0 %v520
    %598 = vmatpush2.bf16.msra.mxu0 %v519
    %599 = vmatprep.mubr.bf16.mxu0 %v362
    %600 = vmatmul.mubr.bf16.gmra.mxu0 %v361
    %v601 = vpop.f32.mrf.mxu0
    %v602 = vadd.f32 %v400, %v601
    %v603 = vpop.f32.mrf.mxu0
    %v604 = vadd.f32 %v404, %v603
    %v605 = vpop.f32.mrf.mxu0
    %v606 = vpop.f32.mrf.mxu0
    %607 = vdwg.mxu0
    %v608 = vmul.f32 %v602, 0.01
    %v609 = vmul.f32 %v604, 0.01
    %v610 = vmax.f32 %v602, %v608
    %v611 = vmax.f32 %v604, %v609
    %v612 = vpack.c.bf16 %v610, %v610
    %v613 = vpack.c.bf16 %v611, %v611
    %v614 = vld [vmem:[#allocation6] sm:$0xf]
    %v615 = vld [vmem:[#allocation6 + $0x4] sm:$0xf]
    %v616 = vld [vmem:[#allocation6 + $0x8] sm:$0xf]
    %v617 = vld [vmem:[#allocation6 + $0xc] sm:$0xf]
    %v618 = vld [vmem:[#allocation6 + $0x10] sm:$0xf]
    %v619 = vld [vmem:[#allocation6 + $0x14] sm:$0xf]
    %v620 = vld [vmem:[#allocation6 + $0x18] sm:$0xf]
    %v621 = vld [vmem:[#allocation6 + $0x1c] sm:$0xf]
    %v622 = vld [vmem:[#allocation6 + $0x20] sm:$0xf]
    %v623 = vld [vmem:[#allocation6 + $0x24] sm:$0xf]
    %v624 = vld [vmem:[#allocation6 + $0x28] sm:$0xf]
    %v625 = vld [vmem:[#allocation6 + $0x2c] sm:$0xf]
    %v626 = vld [vmem:[#allocation6 + $0x30] sm:$0xf]
    %v627 = vld [vmem:[#allocation6 + $0x34] sm:$0xf]
    %v628 = vld [vmem:[#allocation6 + $0x38] sm:$0xf]
    %v629 = vld [vmem:[#allocation6 + $0x3c] sm:$0xf]
    %v630 = vld [vmem:[#allocation6 + $0x40] sm:$0xf]
    %v631 = vld [vmem:[#allocation6 + $0x44] sm:$0xf]
    %v632 = vld [vmem:[#allocation6 + $0x48] sm:$0xf]
    %v633 = vld [vmem:[#allocation6 + $0x4c] sm:$0xf]
    %v634 = vld [vmem:[#allocation6 + $0x50] sm:$0xf]
    %v635 = vld [vmem:[#allocation6 + $0x54] sm:$0xf]
    %v636 = vld [vmem:[#allocation6 + $0x58] sm:$0xf]
    %v637 = vld [vmem:[#allocation6 + $0x5c] sm:$0xf]
    %v638 = vld [vmem:[#allocation6 + $0x60] sm:$0xf]
    %v639 = vld [vmem:[#allocation6 + $0x64] sm:$0xf]
    %v640 = vld [vmem:[#allocation6 + $0x68] sm:$0xf]
    %v641 = vld [vmem:[#allocation6 + $0x6c] sm:$0xf]
    %v642 = vld [vmem:[#allocation6 + $0x70] sm:$0xf]
    %v643 = vld [vmem:[#allocation6 + $0x74] sm:$0xf]
    %v644 = vld [vmem:[#allocation6 + $0x78] sm:$0xf]
    %v645 = vld [vmem:[#allocation6 + $0x7c] sm:$0xf]
    %v646 = vld [vmem:[#allocation7] sm:$0xf]
    %v647 = vld [vmem:[#allocation7 + $0x4] sm:$0xf]
    %v648 = vld [vmem:[#allocation7 + $0x8] sm:$0xf]
    %v649 = vld [vmem:[#allocation7 + $0xc] sm:$0xf]
    %v650 = vld [vmem:[#allocation7 + $0x10] sm:$0xf]
    %v651 = vld [vmem:[#allocation7 + $0x14] sm:$0xf]
    %v652 = vld [vmem:[#allocation7 + $0x18] sm:$0xf]
    %v653 = vld [vmem:[#allocation7 + $0x1c] sm:$0xf]
    %v654 = vld [vmem:[#allocation7 + $0x20] sm:$0xf]
    %v655 = vld [vmem:[#allocation7 + $0x24] sm:$0xf]
    %v656 = vld [vmem:[#allocation7 + $0x28] sm:$0xf]
    %v657 = vld [vmem:[#allocation7 + $0x2c] sm:$0xf]
    %v658 = vld [vmem:[#allocation7 + $0x30] sm:$0xf]
    %v659 = vld [vmem:[#allocation7 + $0x34] sm:$0xf]
    %v660 = vld [vmem:[#allocation7 + $0x38] sm:$0xf]
    %v661 = vld [vmem:[#allocation7 + $0x3c] sm:$0xf]
    %v662 = vld [vmem:[#allocation7 + $0x40] sm:$0xf]
    %v663 = vld [vmem:[#allocation7 + $0x44] sm:$0xf]
    %v664 = vld [vmem:[#allocation7 + $0x48] sm:$0xf]
    %v665 = vld [vmem:[#allocation7 + $0x4c] sm:$0xf]
    %v666 = vld [vmem:[#allocation7 + $0x50] sm:$0xf]
    %v667 = vld [vmem:[#allocation7 + $0x54] sm:$0xf]
    %v668 = vld [vmem:[#allocation7 + $0x58] sm:$0xf]
    %v669 = vld [vmem:[#allocation7 + $0x5c] sm:$0xf]
    %v670 = vld [vmem:[#allocation7 + $0x60] sm:$0xf]
    %v671 = vld [vmem:[#allocation7 + $0x64] sm:$0xf]
    %v672 = vld [vmem:[#allocation7 + $0x68] sm:$0xf]
    %v673 = vld [vmem:[#allocation7 + $0x6c] sm:$0xf]
    %v674 = vld [vmem:[#allocation7 + $0x70] sm:$0xf]
    %v675 = vld [vmem:[#allocation7 + $0x74] sm:$0xf]
    %v676 = vld [vmem:[#allocation7 + $0x78] sm:$0xf]
    %v677 = vld [vmem:[#allocation7 + $0x7c] sm:$0xf]
    %v710 = vunpack.c.l.b16 %v646
    %v711 = vunpack.c.l.b16 %v647
    %v712 = vunpack.c.l.b16 %v648
    %v713 = vunpack.c.l.b16 %v649
    %v714 = vunpack.c.l.b16 %v650
    %v715 = vunpack.c.l.b16 %v651
    %v716 = vunpack.c.l.b16 %v652
    %v717 = vunpack.c.l.b16 %v653
    %v718 = vunpack.c.l.b16 %v654
    %v719 = vunpack.c.l.b16 %v655
    %v720 = vunpack.c.l.b16 %v656
    %v721 = vunpack.c.l.b16 %v657
    %v722 = vunpack.c.l.b16 %v658
    %v723 = vunpack.c.l.b16 %v659
    %v724 = vunpack.c.l.b16 %v660
    %v725 = vunpack.c.l.b16 %v661
    %v726 = vunpack.c.l.b16 %v662
    %v727 = vunpack.c.l.b16 %v663
    %v728 = vunpack.c.l.b16 %v664
    %v729 = vunpack.c.l.b16 %v665
    %v730 = vunpack.c.l.b16 %v666
    %v731 = vunpack.c.l.b16 %v667
    %v732 = vunpack.c.l.b16 %v668
    %v733 = vunpack.c.l.b16 %v669
    %v734 = vunpack.c.l.b16 %v670
    %v735 = vunpack.c.l.b16 %v671
    %v736 = vunpack.c.l.b16 %v672
    %v737 = vunpack.c.l.b16 %v673
    %v738 = vunpack.c.l.b16 %v674
    %v739 = vunpack.c.l.b16 %v675
    %v740 = vunpack.c.l.b16 %v676
    %v741 = vunpack.c.l.b16 %v677
    %v742 = vpack.c.b16 %v711, %v710
    %v743 = vpack.c.b16 %v713, %v712
    %v744 = vpack.c.b16 %v715, %v714
    %v745 = vpack.c.b16 %v717, %v716
    %v746 = vpack.c.b16 %v719, %v718
    %v747 = vpack.c.b16 %v721, %v720
    %v748 = vpack.c.b16 %v723, %v722
    %v749 = vpack.c.b16 %v725, %v724
    %v750 = vpack.c.b16 %v727, %v726
    %v751 = vpack.c.b16 %v729, %v728
    %v752 = vpack.c.b16 %v731, %v730
    %v753 = vpack.c.b16 %v733, %v732
    %v754 = vpack.c.b16 %v735, %v734
    %v755 = vpack.c.b16 %v737, %v736
    %v756 = vpack.c.b16 %v739, %v738
    %v757 = vpack.c.b16 %v741, %v740
    %774 = vmatprep.subr.bf16.mxu0 0
    %775 = vmatpush1.bf16.msra.mxu0 %v749
    %776 = vmatprep.subr.bf16.mxu0 0
    %777 = vmatpush1.bf16.msra.mxu0 %v748
    %778 = vmatprep.subr.bf16.mxu0 0
    %779 = vmatpush1.bf16.msra.mxu0 %v747
    %780 = vmatprep.subr.bf16.mxu0 0
    %781 = vmatpush1.bf16.msra.mxu0 %v746
    %782 = vmatprep.subr.bf16.mxu0 0
    %783 = vmatpush1.bf16.msra.mxu0 %v745
    %784 = vmatprep.subr.bf16.mxu0 0
    %785 = vmatpush1.bf16.msra.mxu0 %v744
    %786 = vmatprep.subr.bf16.mxu0 0
    %787 = vmatpush1.bf16.msra.mxu0 %v743
    %788 = vmatprep.subr.bf16.mxu0 0
    %789 = vmatpush1.bf16.msra.mxu0 %v742
    %790 = vmatprep.subr.bf16.mxu0 0
    %791 = vmatpush2.bf16.msra.mxu0 %v757
    %792 = vmatprep.subr.bf16.mxu0 0
    %793 = vmatpush2.bf16.msra.mxu0 %v756
    %794 = vmatprep.subr.bf16.mxu0 0
    %795 = vmatpush2.bf16.msra.mxu0 %v755
    %796 = vmatprep.subr.bf16.mxu0 0
    %797 = vmatpush2.bf16.msra.mxu0 %v754
    %798 = vmatprep.subr.bf16.mxu0 0
    %799 = vmatpush2.bf16.msra.mxu0 %v753
    %800 = vmatprep.subr.bf16.mxu0 0
    %801 = vmatpush2.bf16.msra.mxu0 %v752
    %802 = vmatprep.subr.bf16.mxu0 0
    %803 = vmatpush2.bf16.msra.mxu0 %v751
    %804 = vmatprep.subr.bf16.mxu0 0
    %805 = vmatpush2.bf16.msra.mxu0 %v750
    %806 = vmatprep.mubr.bf16.mxu0 %v362
    %807 = vmatmul.mubr.bf16.gmra.mxu0 %v361
    %v808 = vpop.f32.mrf.mxu0
    %v809 = vadd.f32 0.0, %v808
    %v810 = vpop.f32.mrf.mxu0
    %v811 = vpop.f32.mrf.mxu0
    %v812 = vpop.f32.mrf.mxu0
    %813 = vdwg.mxu0
    %v846 = vunpack.c.l.b16 %v614
    %v847 = vunpack.c.l.b16 %v615
    %v848 = vunpack.c.l.b16 %v616
    %v849 = vunpack.c.l.b16 %v617
    %v850 = vunpack.c.l.b16 %v618
    %v851 = vunpack.c.l.b16 %v619
    %v852 = vunpack.c.l.b16 %v620
    %v853 = vunpack.c.l.b16 %v621
    %v854 = vunpack.c.l.b16 %v622
    %v855 = vunpack.c.l.b16 %v623
    %v856 = vunpack.c.l.b16 %v624
    %v857 = vunpack.c.l.b16 %v625
    %v858 = vunpack.c.l.b16 %v626
    %v859 = vunpack.c.l.b16 %v627
    %v860 = vunpack.c.l.b16 %v628
    %v861 = vunpack.c.l.b16 %v629
    %v862 = vunpack.c.l.b16 %v630
    %v863 = vunpack.c.l.b16 %v631
    %v864 = vunpack.c.l.b16 %v632
    %v865 = vunpack.c.l.b16 %v633
    %v866 = vunpack.c.l.b16 %v634
    %v867 = vunpack.c.l.b16 %v635
    %v868 = vunpack.c.l.b16 %v636
    %v869 = vunpack.c.l.b16 %v637
    %v870 = vunpack.c.l.b16 %v638
    %v871 = vunpack.c.l.b16 %v639
    %v872 = vunpack.c.l.b16 %v640
    %v873 = vunpack.c.l.b16 %v641
    %v874 = vunpack.c.l.b16 %v642
    %v875 = vunpack.c.l.b16 %v643
    %v876 = vunpack.c.l.b16 %v644
    %v877 = vunpack.c.l.b16 %v645
    %v878 = vpack.c.b16 %v847, %v846
    %v879 = vpack.c.b16 %v849, %v848
    %v880 = vpack.c.b16 %v851, %v850
    %v881 = vpack.c.b16 %v853, %v852
    %v882 = vpack.c.b16 %v855, %v854
    %v883 = vpack.c.b16 %v857, %v856
    %v884 = vpack.c.b16 %v859, %v858
    %v885 = vpack.c.b16 %v861, %v860
    %v886 = vpack.c.b16 %v863, %v862
    %v887 = vpack.c.b16 %v865, %v864
    %v888 = vpack.c.b16 %v867, %v866
    %v889 = vpack.c.b16 %v869, %v868
    %v890 = vpack.c.b16 %v871, %v870
    %v891 = vpack.c.b16 %v873, %v872
    %v892 = vpack.c.b16 %v875, %v874
    %v893 = vpack.c.b16 %v877, %v876
    %910 = vmatprep.subr.bf16.mxu0 0
    %911 = vmatpush1.bf16.msra.mxu0 %v885
    %912 = vmatprep.subr.bf16.mxu0 0
    %913 = vmatpush1.bf16.msra.mxu0 %v884
    %914 = vmatprep.subr.bf16.mxu0 0
    %915 = vmatpush1.bf16.msra.mxu0 %v883
    %916 = vmatprep.subr.bf16.mxu0 0
    %917 = vmatpush1.bf16.msra.mxu0 %v882
    %918 = vmatprep.subr.bf16.mxu0 0
    %919 = vmatpush1.bf16.msra.mxu0 %v881
    %920 = vmatprep.subr.bf16.mxu0 0
    %921 = vmatpush1.bf16.msra.mxu0 %v880
    %922 = vmatprep.subr.bf16.mxu0 0
    %923 = vmatpush1.bf16.msra.mxu0 %v879
    %924 = vmatprep.subr.bf16.mxu0 0
    %925 = vmatpush1.bf16.msra.mxu0 %v878
    %926 = vmatprep.subr.bf16.mxu0 0
    %927 = vmatpush2.bf16.msra.mxu0 %v893
    %928 = vmatprep.subr.bf16.mxu0 0
    %929 = vmatpush2.bf16.msra.mxu0 %v892
    %930 = vmatprep.subr.bf16.mxu0 0
    %931 = vmatpush2.bf16.msra.mxu0 %v891
    %932 = vmatprep.subr.bf16.mxu0 0
    %933 = vmatpush2.bf16.msra.mxu0 %v890
    %934 = vmatprep.subr.bf16.mxu0 0
    %935 = vmatpush2.bf16.msra.mxu0 %v889
    %936 = vmatprep.subr.bf16.mxu0 0
    %937 = vmatpush2.bf16.msra.mxu0 %v888
    %938 = vmatprep.subr.bf16.mxu0 0
    %939 = vmatpush2.bf16.msra.mxu0 %v887
    %940 = vmatprep.subr.bf16.mxu0 0
    %941 = vmatpush2.bf16.msra.mxu0 %v886
    %942 = vmatprep.mubr.bf16.mxu0 %v613
    %943 = vmatmul.mubr.bf16.gmra.mxu0 %v612
    %v944 = vpop.f32.mrf.mxu0
    %v945 = vadd.f32 %v809, %v944
    %v946 = vpop.f32.mrf.mxu0
    %v947 = vpop.f32.mrf.mxu0
    %v948 = vpop.f32.mrf.mxu0
    %949 = vdwg.mxu0
    %v950 = vld [vmem:[%s7] sm:$0x1]
    %v952 = vlaneseq
    %v953 = vshrl.u32 %v952, 7
    %v954 = vsub.s32 0, %v953
    %v955 = vrot.slane %v950, %v954
    %v957 = vadd.f32 %v945, %v955
    %v958 = vmul.f32 %v957, 0.01
    %v959 = vmax.f32 %v957, %v958
    %v960 = vpack.c.bf16 %v959, %v959
    %v961 = vld [vmem:[#allocation9] sm:$0xf]
    %v962 = vld [vmem:[#allocation9 + $0x4] sm:$0xf]
    %v963 = vld [vmem:[#allocation9 + $0x8] sm:$0xf]
    %v964 = vld [vmem:[#allocation9 + $0xc] sm:$0xf]
    %v965 = vld [vmem:[#allocation9 + $0x10] sm:$0xf]
    %v966 = vld [vmem:[#allocation9 + $0x14] sm:$0xf]
    %v967 = vld [vmem:[#allocation9 + $0x18] sm:$0xf]
    %v968 = vld [vmem:[#allocation9 + $0x1c] sm:$0xf]
    %v969 = vld [vmem:[#allocation9 + $0x20] sm:$0xf]
    %v970 = vld [vmem:[#allocation9 + $0x24] sm:$0xf]
    %v971 = vld [vmem:[#allocation9 + $0x28] sm:$0xf]
    %v972 = vld [vmem:[#allocation9 + $0x2c] sm:$0xf]
    %v973 = vld [vmem:[#allocation9 + $0x30] sm:$0xf]
    %v974 = vld [vmem:[#allocation9 + $0x34] sm:$0xf]
    %v975 = vld [vmem:[#allocation9 + $0x38] sm:$0xf]
    %v976 = vld [vmem:[#allocation9 + $0x3c] sm:$0xf]
    %v977 = vld [vmem:[%s9] sm:$0x1]
    %v979 = vlaneseq
    %v980 = vshrl.u32 %v979, 7
    %v981 = vsub.s32 0, %v980
    %v982 = vrot.slane %v977, %v981
    %v1000 = vunpack.c.l.b16 %v961
    %v1001 = vunpack.c.l.b16 %v962
    %v1002 = vunpack.c.l.b16 %v963
    %v1003 = vunpack.c.l.b16 %v964
    %v1004 = vunpack.c.l.b16 %v965
    %v1005 = vunpack.c.l.b16 %v966
    %v1006 = vunpack.c.l.b16 %v967
    %v1007 = vunpack.c.l.b16 %v968
    %v1008 = vunpack.c.l.b16 %v969
    %v1009 = vunpack.c.l.b16 %v970
    %v1010 = vunpack.c.l.b16 %v971
    %v1011 = vunpack.c.l.b16 %v972
    %v1012 = vunpack.c.l.b16 %v973
    %v1013 = vunpack.c.l.b16 %v974
    %v1014 = vunpack.c.l.b16 %v975
    %v1015 = vunpack.c.l.b16 %v976
    %v1016 = vpack.c.b16 %v1001, %v1000
    %v1017 = vpack.c.b16 %v1003, %v1002
    %v1018 = vpack.c.b16 %v1005, %v1004
    %v1019 = vpack.c.b16 %v1007, %v1006
    %v1020 = vpack.c.b16 %v1009, %v1008
    %v1021 = vpack.c.b16 %v1011, %v1010
    %v1022 = vpack.c.b16 %v1013, %v1012
    %v1023 = vpack.c.b16 %v1015, %v1014
    %1032 = vmatprep.subr.bf16.mxu0 0
    %1033 = vmatpush1.bf16.msra.mxu0 %v1023
    %1034 = vmatprep.subr.bf16.mxu0 0
    %1035 = vmatpush1.bf16.msra.mxu0 %v1022
    %1036 = vmatprep.subr.bf16.mxu0 0
    %1037 = vmatpush1.bf16.msra.mxu0 %v1021
    %1038 = vmatprep.subr.bf16.mxu0 0
    %1039 = vmatpush1.bf16.msra.mxu0 %v1020
    %1040 = vmatprep.subr.bf16.mxu0 0
    %1041 = vmatpush1.bf16.msra.mxu0 %v1019
    %1042 = vmatprep.subr.bf16.mxu0 0
    %1043 = vmatpush1.bf16.msra.mxu0 %v1018
    %1044 = vmatprep.subr.bf16.mxu0 0
    %1045 = vmatpush1.bf16.msra.mxu0 %v1017
    %1046 = vmatprep.subr.bf16.mxu0 0
    %1047 = vmatpush1.bf16.msra.mxu0 %v1016
    %1048 = vmatprep.subr.bf16.mxu0 0
    %1049 = vmatpush2.bf16.msra.mxu0 0
    %1050 = vmatprep.subr.bf16.mxu0 0
    %1051 = vmatpush2.bf16.msra.mxu0 0
    %1052 = vmatprep.subr.bf16.mxu0 0
    %1053 = vmatpush2.bf16.msra.mxu0 0
    %1054 = vmatprep.subr.bf16.mxu0 0
    %1055 = vmatpush2.bf16.msra.mxu0 0
    %1056 = vmatprep.subr.bf16.mxu0 0
    %1057 = vmatpush2.bf16.msra.mxu0 0
    %1058 = vmatprep.subr.bf16.mxu0 0
    %1059 = vmatpush2.bf16.msra.mxu0 0
    %1060 = vmatprep.subr.bf16.mxu0 0
    %1061 = vmatpush2.bf16.msra.mxu0 0
    %1062 = vmatprep.subr.bf16.mxu0 0
    %1063 = vmatpush2.bf16.msra.mxu0 0
    %1064 = vmatprep.mubr.bf16.mxu0 0
    %1065 = vmatmul.mubr.bf16.gmra.mxu0 %v960
    %v1066 = vpop.f32.mrf.mxu0
    %v1067 = vadd.f32 %v982, %v1066
    %v1068 = vpop.f32.mrf.mxu0
    %v1069 = vpop.f32.mrf.mxu0
    %v1070 = vpop.f32.mrf.mxu0
    %1071 = vdwg.mxu0
    %1072 = vst [vmem:[%s10] sm:$0xff] %v1067
    // Predicated region
    $region62: #{kcs_path_forward.1} parent=1 // pred_check
      _
    $region63: #{kcs_path_forward.1} parent=1 // pred_check_branch
      %1074 = sbr.rel (0) target = $region65
    $region64: #{kcs_path_forward.1} parent=1 // pred_region
      _
    $region65: #{kcs_path_forward.1} parent=1 // pred_fallthru
      _
    // Predicated region
    $region66: #{kcs_path_forward.1} parent=1 // pred_check
      _
    $region67: #{kcs_path_forward.1} parent=1 // pred_check_branch
      %1076 = sbr.rel (0) target = $region69
    $region68: #{kcs_path_forward.1} parent=1 // pred_region
      _
    $region69: #{kcs_path_forward.1} parent=1 // pred_fallthru
      _
    %1077 = vsyncpa [#allocation3], 1
    %1078 = vsyncpa [#allocation5], 1
    %1079 = vsyncpa [#allocation8], 1

</llo_original>
